<compile_context>
chip_gen: v7x
topology: tpu7x:2x2x1
jax: 0.10.0
libtpu: 0.0.40
codegen_flags: <defaults>
</compile_context>

<pallas_src>
import jax
import jax.numpy as jnp
from jax.experimental import pallas as pl
from jax.experimental.pallas import tpu as pltpu

_LANE = 128
_SUBLANE = 8
_ALIGN = _SUBLANE * _LANE  # 1024


def _make_merged_kernel(n_layers):
    def kernel(w_ref, *refs):
        # refs = (x_0, ..., x_{L-1}, out); w_ref holds softmax(alpha) in SMEM.
        x_refs = refs[:n_layers]
        o_ref = refs[n_layers]
        acc = w_ref[0] * x_refs[0][...].astype(jnp.float32)
        for l in range(1, n_layers):
            acc = acc + w_ref[l] * x_refs[l][...].astype(jnp.float32)
        o_ref[...] = acc.astype(o_ref.dtype)

    return kernel


def _choose_lane_width(total):
    """Widest lane width (multiple of 128) dividing `total`, preferring >=8 rows."""
    fallback = None
    for cand in (4096, 2048, 1024, 512, 256, _LANE):
        if total % cand == 0:
            if fallback is None:
                fallback = cand
            if total // cand >= _SUBLANE:
                return cand
    return fallback  # None if total is not a multiple of 128


def _vmem_policy():
    # (block working-set budget, scoped VMEM limit).  Conservative default is
    # sized for v7x (64 MiB physical VMEM per TensorCore); chips with 128 MiB
    # VMEM (v5e / v6e) get a bigger budget to amortize per-grid-step overhead.
    block_budget, vmem_limit = 24 << 20, 32 << 20
    try:
        cap = getattr(pltpu.get_tpu_info(), "vmem_capacity_bytes", 0)
        if cap >= (128 << 20):
            block_budget, vmem_limit = 32 << 20, 48 << 20
    except Exception:
        pass
    return block_budget, vmem_limit


def _dimension_semantics():
    # v7x has two TensorCores per chip: shard the row-tile axis across them so
    # both cores stream HBM.  On single-TC chips (v5e/v6e) plain PARALLEL is a
    # near no-op and always safe.
    try:
        kind = jax.devices()[0].device_kind.lower()
        if "v7" in kind or "7x" in kind:
            return (pltpu.CORE_PARALLEL,)
    except Exception:
        pass
    return (pltpu.PARALLEL,)


def _choose_tile_rows(rows, lane_width, n_layers, dtype_bytes, block_budget):
    # Per grid step: double-buffered HBM blocks (L inputs + 1 output) plus ~two
    # block-sized fp32 accumulator temporaries living in VMEM/vregs.
    bytes_per_row = (2 * (n_layers + 1) * dtype_bytes + 2 * 4) * lane_width
    cap = max(_SUBLANE, block_budget // bytes_per_row)
    if rows <= _SUBLANE:
        return rows  # block dim equals the full array dim (always legal)
    tile = min(rows, cap)
    return max(_SUBLANE, (tile // _SUBLANE) * _SUBLANE)


def _merged_slabs(weights, slabs, out_dtype):
    """Fused softmax-weighted sum over L equally-shaped (rows, lane) slabs."""
    n_layers = len(slabs)
    rows, lane_width = slabs[0].shape
    dtype_bytes = jnp.dtype(out_dtype).itemsize
    block_budget, vmem_limit = _vmem_policy()
    tile_rows = _choose_tile_rows(rows, lane_width, n_layers, dtype_bytes,
                                  block_budget)
    grid = (pl.cdiv(rows, tile_rows),)  # partial last block is masked by Pallas

    block = pl.BlockSpec((tile_rows, lane_width), lambda i: (i, 0))
    n_elems = rows * lane_width
    cost = pl.CostEstimate(
        flops=2 * n_layers * n_elems,
        transcendentals=0,
        bytes_accessed=(n_layers + 1) * n_elems * dtype_bytes,
    )
    return pl.pallas_call(
        _make_merged_kernel(n_layers),
        out_shape=jax.ShapeDtypeStruct((rows, lane_width), out_dtype),
        grid=grid,
        in_specs=[pl.BlockSpec(memory_space=pltpu.MemorySpace.SMEM)]
        + [block] * n_layers,
        out_specs=block,
        compiler_params=pltpu.CompilerParams(
            dimension_semantics=_dimension_semantics(),
            vmem_limit_bytes=vmem_limit,
        ),
        cost_estimate=cost,
    )(weights, *slabs)


def merged_op_forward(alpha, xs):
    """softmax(alpha)-weighted sum of the candidate tensors xs (all same shape)."""
    xs = list(xs)
    n_layers = len(xs)
    assert n_layers >= 1 and alpha.shape == (n_layers,)
    orig_shape = xs[0].shape
    orig_dtype = xs[0].dtype
    assert all(x.shape == orig_shape for x in xs), "candidate shapes must match"
    assert all(x.dtype == orig_dtype for x in xs), "candidate dtypes must match"

    # Softmax over the L architecture params: O(L) scalars -> plain jnp,
    # handed to the kernel via SMEM.
    weights = jax.nn.softmax(alpha.astype(jnp.float32), axis=0)

    total = int(xs[0].size)
    flats = [x.reshape(-1) for x in xs]  # metadata-only

    lane_width = _choose_lane_width(total)
    if lane_width is not None:
        # Common case: element count divisible by the lane width -> the 2-D
        # slab reshapes (in and out) are metadata-only; no pad, no slice.
        rows = total // lane_width
        slabs = [f.reshape(rows, lane_width) for f in flats]
        return _merged_slabs(weights, slabs, orig_dtype).reshape(orig_shape)

    # Rare path: element count not a multiple of 128.  Stream the aligned
    # prefix through the kernel; finish the (<1024-element) tail in plain jnp.
    aligned = (total // _ALIGN) * _ALIGN
    tail = sum(w * f[aligned:].astype(jnp.float32)
               for w, f in zip(weights, flats)).astype(orig_dtype)
    if aligned == 0:
        return tail.reshape(orig_shape)
    head_lane = _choose_lane_width(aligned)
    head_rows = aligned // head_lane
    head_slabs = [f[:aligned].reshape(head_rows, head_lane) for f in flats]
    head = _merged_slabs(weights, head_slabs, orig_dtype).reshape(-1)
    return jnp.concatenate([head, tail]).reshape(orig_shape)


class MergedOpPallas:
    """Pallas version of hwdnas MergedOp: mixes candidate ops via softmax(alpha)."""

    def __init__(self, in_layers):
        # Matches nn.Parameter(torch.zeros(in_layers)).
        self.alpha = jnp.zeros((in_layers,), dtype=jnp.float32)

    def __call__(self, xs):
        return merged_op_forward(self.alpha, xs)


if __name__ == "__main__":
    key = jax.random.PRNGKey(0)
    in_layers = 4
    shape = (2, 4, 16, 16)  # NCHW, small toy activation (2048 elems -> slab path)

    keys = jax.random.split(key, in_layers + 1)
    xs = [jax.random.normal(keys[i], shape, dtype=jnp.float32)
          for i in range(in_layers)]

    module = MergedOpPallas(in_layers)

    # Default alpha = zeros -> uniform weights.
    y = jax.block_until_ready(module(xs))
    w = jax.nn.softmax(module.alpha)
    ref = sum(wi * xi for wi, xi in zip(w, xs))
    assert y.shape == shape and y.dtype == xs[0].dtype
    assert bool(jnp.allclose(y, ref, rtol=1e-6, atol=1e-6))

    # Non-uniform alpha to exercise the softmax weighting path.
    module.alpha = jax.random.normal(keys[-1], (in_layers,), dtype=jnp.float32)
    y2 = jax.block_until_ready(module(xs))
    w2 = jax.nn.softmax(module.alpha)
    ref2 = sum(wi * xi for wi, xi in zip(w2, xs))
    assert bool(jnp.allclose(y2, ref2, rtol=1e-6, atol=1e-6))

    # Element count not a multiple of 128: exercises the aligned-prefix kernel
    # path plus the plain-jnp tail.
    shape_tail = (3, 40, 13)  # 1560 elems -> 1024 via the kernel + 536 tail
    xs_tail = [jax.random.normal(keys[i], shape_tail, dtype=jnp.float32)
               for i in range(in_layers)]
    y3 = jax.block_until_ready(module(xs_tail))
    ref3 = sum(wi * xi for wi, xi in zip(w2, xs_tail))
    assert y3.shape == shape_tail
    assert bool(jnp.allclose(y3, ref3, rtol=1e-6, atol=1e-6))

    print("KERNEL_OK")
</pallas_src>

<mosaic_0001>
module attributes {stable_mosaic.version = 11 : i64} {
  func.func @kernel(%arg0: i32, %arg1: memref<4xf32, #tpu.memory_space<smem>>, %arg2: memref<8x256xf32, #tpu.memory_space<vmem>>, %arg3: memref<8x256xf32, #tpu.memory_space<vmem>>, %arg4: memref<8x256xf32, #tpu.memory_space<vmem>>, %arg5: memref<8x256xf32, #tpu.memory_space<vmem>>, %arg6: memref<8x256xf32, #tpu.memory_space<vmem>>) attributes {dimension_semantics = [#tpu.dimension_semantics<parallel>], iteration_bounds = array<i64: 1>, scalar_prefetch = 0 : i64, scratch_operands = 0 : i64, tpu.core_type = #tpu.core_type<tc>, window_params = [{transform_indices = @transform_0, window_bounds = array<i64: 4>}, {transform_indices = @transform_1, window_bounds = array<i64: 8, 256>}, {transform_indices = @transform_2, window_bounds = array<i64: 8, 256>}, {transform_indices = @transform_3, window_bounds = array<i64: 8, 256>}, {transform_indices = @transform_4, window_bounds = array<i64: 8, 256>}, {transform_indices = @transform_5, window_bounds = array<i64: 8, 256>}]} {
    %c0 = arith.constant 0 : index
    %0 = memref.load %arg1[%c0] : memref<4xf32, #tpu.memory_space<smem>>
    %c0_0 = arith.constant 0 : index
    %c0_1 = arith.constant 0 : index
    %1 = vector.load %arg2[%c0_0, %c0_1] : memref<8x256xf32, #tpu.memory_space<vmem>>, vector<8x256xf32>
    %2 = vector.broadcast %0 : f32 to vector<8x256xf32>
    %3 = arith.mulf %2, %1 : vector<8x256xf32>
    %c1 = arith.constant 1 : index
    %4 = memref.load %arg1[%c1] : memref<4xf32, #tpu.memory_space<smem>>
    %c0_2 = arith.constant 0 : index
    %c0_3 = arith.constant 0 : index
    %5 = vector.load %arg3[%c0_2, %c0_3] : memref<8x256xf32, #tpu.memory_space<vmem>>, vector<8x256xf32>
    %6 = vector.broadcast %4 : f32 to vector<8x256xf32>
    %7 = arith.mulf %6, %5 : vector<8x256xf32>
    %8 = arith.addf %3, %7 : vector<8x256xf32>
    %c2 = arith.constant 2 : index
    %9 = memref.load %arg1[%c2] : memref<4xf32, #tpu.memory_space<smem>>
    %c0_4 = arith.constant 0 : index
    %c0_5 = arith.constant 0 : index
    %10 = vector.load %arg4[%c0_4, %c0_5] : memref<8x256xf32, #tpu.memory_space<vmem>>, vector<8x256xf32>
    %11 = vector.broadcast %9 : f32 to vector<8x256xf32>
    %12 = arith.mulf %11, %10 : vector<8x256xf32>
    %13 = arith.addf %8, %12 : vector<8x256xf32>
    %c3 = arith.constant 3 : index
    %14 = memref.load %arg1[%c3] : memref<4xf32, #tpu.memory_space<smem>>
    %c0_6 = arith.constant 0 : index
    %c0_7 = arith.constant 0 : index
    %15 = vector.load %arg5[%c0_6, %c0_7] : memref<8x256xf32, #tpu.memory_space<vmem>>, vector<8x256xf32>
    %16 = vector.broadcast %14 : f32 to vector<8x256xf32>
    %17 = arith.mulf %16, %15 : vector<8x256xf32>
    %18 = arith.addf %13, %17 : vector<8x256xf32>
    %c0_8 = arith.constant 0 : index
    %c0_9 = arith.constant 0 : index
    %19 = vector.load %arg6[%c0_8, %c0_9] : memref<8x256xf32, #tpu.memory_space<vmem>>, vector<8x256xf32>
    tpu.vector_store %arg6[%c0_8, %c0_9], %18 {strides = array<i32>} : memref<8x256xf32, #tpu.memory_space<vmem>>, vector<8x256xf32>,
    return
  }
  func.func @transform_0(%arg0: i32) -> i32 {
    %c0_i32 = arith.constant 0 : i32
    %c0_i32_0 = arith.constant 0 : i32
    return %c0_i32 : i32
  }
  func.func @transform_1(%arg0: i32) -> (i32, i32) {
    %c0_i32 = arith.constant 0 : i32
    %c0_i32_0 = arith.constant 0 : i32
    return %arg0, %c0_i32 : i32, i32
  }
  func.func @transform_2(%arg0: i32) -> (i32, i32) {
    %c0_i32 = arith.constant 0 : i32
    %c0_i32_0 = arith.constant 0 : i32
    return %arg0, %c0_i32 : i32, i32
  }
  func.func @transform_3(%arg0: i32) -> (i32, i32) {
    %c0_i32 = arith.constant 0 : i32
    %c0_i32_0 = arith.constant 0 : i32
    return %arg0, %c0_i32 : i32, i32
  }
  func.func @transform_4(%arg0: i32) -> (i32, i32) {
    %c0_i32 = arith.constant 0 : i32
    %c0_i32_0 = arith.constant 0 : i32
    return %arg0, %c0_i32 : i32, i32
  }
  func.func @transform_5(%arg0: i32) -> (i32, i32) {
    %c0_i32 = arith.constant 0 : i32
    %c0_i32_0 = arith.constant 0 : i32
    return %arg0, %c0_i32 : i32, i32
  }
}

</mosaic_0001>

<llo_original>
// kernel: tpu_custom_call.1
$region0: #{tpu_custom_call.1}
  #allocation0 [shape = 'u32[]', space=smem, size = 0x4, offset = 0x4, fixed_abs, tag = 'smem constant byte address 0x4 - core index']
  #allocation1 [shape = 'u32[144,128]{1,0:T(1,128)}', space=vmem, size = 0x12000, scoped, tag = 'internal scratch']
  %s0 = inlined_call_operand.hbm [shape: f32[4], index: 0, kind: input, shape index: {}]
  %s1 = inlined_call_operand.hbm [shape: f32[8,256], index: 1, kind: input, shape index: {}]
  %s2 = inlined_call_operand.hbm [shape: f32[8,256], index: 2, kind: input, shape index: {}]
  %s3 = inlined_call_operand.hbm [shape: f32[8,256], index: 3, kind: input, shape index: {}]
  %s4 = inlined_call_operand.hbm [shape: f32[8,256], index: 4, kind: input, shape index: {}]
  %s5 = inlined_call_operand.hbm [shape: f32[8,256], index: 5, kind: output, shape index: {}]
  %s6 = sld [smem:[#allocation0]]
  $region50: #{tpu_custom_call.1} parent=0
    _
  %s8 = ssub.s32 1, %s6
  %s9 = scalar_select 0, %s8, %s6
  $region1: #{tpu_custom_call.1} parent=0
    #allocation2 [shape = 'u8[512]{0}', space=smem, size = 0x200, scoped, tag = 'input window, operand 0, single buffered']
    #allocation3 [shape = 's32[1]{0}', space=sflag, size = 0x4, scoped, tag = 'scoped memory for tpu_custom_call.1']
    #allocation4 [shape = 's32[1]{0}', space=sflag, size = 0x4, scoped, tag = 'scoped memory for tpu_custom_call.1']
    #allocation5 [shape = 's32[1]{0}', space=sflag, size = 0x4, scoped, tag = 'scoped memory for tpu_custom_call.1']
    #allocation6 [shape = 'u8[8192]{0}', space=vmem, size = 0x2000, scoped, tag = 'input window, operand 1, single buffered']
    #allocation7 [shape = 'u8[8192]{0}', space=vmem, size = 0x2000, scoped, tag = 'input window, operand 2, single buffered']
    #allocation8 [shape = 's32[1]{0}', space=sflag, size = 0x4, scoped, tag = 'scoped memory for tpu_custom_call.1']
    #allocation9 [shape = 'u8[8192]{0}', space=vmem, size = 0x2000, scoped, tag = 'input window, operand 3, single buffered']
    #allocation10 [shape = 'u8[8192]{0}', space=vmem, size = 0x2000, scoped, tag = 'input window, operand 4, single buffered']
    #allocation11 [shape = 's32[1]{0}', space=sflag, size = 0x4, scoped, tag = 'scoped memory for tpu_custom_call.1']
    #allocation12 [shape = 'u8[8192]{0}', space=vmem, size = 0x2000, scoped, tag = 'output window, operand 0, single buffered']
    %10 = vsyncpa [#allocation5], 0
    %11 = vsyncpa [#allocation3], 0
    %12 = vsyncpa [#allocation8], 0
    %13 = vsyncpa [#allocation11], 0
    %14 = vsyncpa [#allocation4], 0
    // Predicated region
    $region2: #{tpu_custom_call.1} parent=1 // pred_check
      _
    $region3: #{tpu_custom_call.1} parent=1 // pred_check_branch
      %16 = sbr.rel (0) target = $region5
    $region4: #{tpu_custom_call.1} parent=1 // pred_region
      %s18 = ssub.s32 16, 16
      %19 = vsyncadd [#allocation5], %s18
      %22 = dma.hbm_to_smem %s0, 16, [#allocation2], [#allocation5]
    $region5: #{tpu_custom_call.1} parent=1 // pred_fallthru
      _
    // Predicated region
    $region6: #{tpu_custom_call.1} parent=1 // pred_check
      _
    $region7: #{tpu_custom_call.1} parent=1 // pred_check_branch
      %24 = sbr.rel (0) target = $region9
    $region8: #{tpu_custom_call.1} parent=1 // pred_region
      %s26 = ssub.s32 256, 256
      %27 = vsyncadd [#allocation3], %s26
      %s29 = sshll.u32 [#allocation6], 4
      %s30 = int_to_ptr.vmem [resolvable:$true] %s29
      %32 = dma.hbm_to_vmem [thread:$0]  %s1, 256, %s30, [#allocation3]
    $region9: #{tpu_custom_call.1} parent=1 // pred_fallthru
      _
    // Predicated region
    $region10: #{tpu_custom_call.1} parent=1 // pred_check
      _
    $region11: #{tpu_custom_call.1} parent=1 // pred_check_branch
      %34 = sbr.rel (0) target = $region13
    $region12: #{tpu_custom_call.1} parent=1 // pred_region
      %s36 = ssub.s32 256, 256
      %37 = vsyncadd [#allocation8], %s36
      %s39 = sshll.u32 [#allocation7], 4
      %s40 = int_to_ptr.vmem [resolvable:$true] %s39
      %42 = dma.hbm_to_vmem [thread:$0]  %s2, 256, %s40, [#allocation8]
    $region13: #{tpu_custom_call.1} parent=1 // pred_fallthru
      _
    // Predicated region
    $region14: #{tpu_custom_call.1} parent=1 // pred_check
      _
    $region15: #{tpu_custom_call.1} parent=1 // pred_check_branch
      %44 = sbr.rel (0) target = $region17
    $region16: #{tpu_custom_call.1} parent=1 // pred_region
      %s46 = ssub.s32 256, 256
      %47 = vsyncadd [#allocation8], %s46
      %s49 = sshll.u32 [#allocation9], 4
      %s50 = int_to_ptr.vmem [resolvable:$true] %s49
      %52 = dma.hbm_to_vmem [thread:$0]  %s3, 256, %s50, [#allocation8]
    $region17: #{tpu_custom_call.1} parent=1 // pred_fallthru
      _
    // Predicated region
    $region18: #{tpu_custom_call.1} parent=1 // pred_check
      _
    $region19: #{tpu_custom_call.1} parent=1 // pred_check_branch
      %54 = sbr.rel (0) target = $region21
    $region20: #{tpu_custom_call.1} parent=1 // pred_region
      %s56 = ssub.s32 256, 256
      %57 = vsyncadd [#allocation11], %s56
      %s59 = sshll.u32 [#allocation10], 4
      %s60 = int_to_ptr.vmem [resolvable:$true] %s59
      %62 = dma.hbm_to_vmem [thread:$0]  %s4, 256, %s60, [#allocation11]
    $region21: #{tpu_custom_call.1} parent=1 // pred_fallthru
      _
    // Predicated region
    $region22: #{tpu_custom_call.1} parent=1 // pred_check
      _
    $region23: #{tpu_custom_call.1} parent=1 // pred_check_branch
      %64 = sbr.rel (0) target = $region25
    $region24: #{tpu_custom_call.1} parent=1 // pred_region
      %65 = dma.done [#allocation5], 16
    $region25: #{tpu_custom_call.1} parent=1 // pred_fallthru
      _
    // Predicated region
    $region26: #{tpu_custom_call.1} parent=1 // pred_check
      _
    $region27: #{tpu_custom_call.1} parent=1 // pred_check_branch
      %67 = sbr.rel (0) target = $region29
    $region28: #{tpu_custom_call.1} parent=1 // pred_region
      %68 = dma.done [#allocation3], 256
    $region29: #{tpu_custom_call.1} parent=1 // pred_fallthru
      _
    // Predicated region
    $region30: #{tpu_custom_call.1} parent=1 // pred_check
      _
    $region31: #{tpu_custom_call.1} parent=1 // pred_check_branch
      %70 = sbr.rel (0) target = $region33
    $region32: #{tpu_custom_call.1} parent=1 // pred_region
      %71 = dma.done [#allocation8], 256
    $region33: #{tpu_custom_call.1} parent=1 // pred_fallthru
      _
    // Predicated region
    $region34: #{tpu_custom_call.1} parent=1 // pred_check
      _
    $region35: #{tpu_custom_call.1} parent=1 // pred_check_branch
      %73 = sbr.rel (0) target = $region37
    $region36: #{tpu_custom_call.1} parent=1 // pred_region
      %74 = dma.done [#allocation8], 256
    $region37: #{tpu_custom_call.1} parent=1 // pred_fallthru
      _
    // Predicated region
    $region38: #{tpu_custom_call.1} parent=1 // pred_check
      _
    $region39: #{tpu_custom_call.1} parent=1 // pred_check_branch
      %76 = sbr.rel (0) target = $region41
    $region40: #{tpu_custom_call.1} parent=1 // pred_region
      %77 = dma.done [#allocation11], 256
    $region41: #{tpu_custom_call.1} parent=1 // pred_fallthru
      _
    %78 = sfence
    %s79 = sld [smem:[#allocation2]]
    %v80 = vld [vmem:[#allocation6] sm:$0xff]
    %v81 = vld [vmem:[#allocation6 + $0x8] sm:$0xff]
    %v82 = vstv %s79
    %v83 = vmul.f32 %v82, %v80
    %v84 = vmul.f32 %v82, %v81
    %s85 = sld [smem:[#allocation2 + $0x1]]
    %v86 = vld [vmem:[#allocation7] sm:$0xff]
    %v87 = vld [vmem:[#allocation7 + $0x8] sm:$0xff]
    %v88 = vstv %s85
    %v89 = vmul.f32 %v88, %v86
    %v90 = vmul.f32 %v88, %v87
    %v91 = vadd.f32 %v83, %v89
    %v92 = vadd.f32 %v84, %v90
    %s93 = sld [smem:[#allocation2 + $0x2]]
    %v94 = vld [vmem:[#allocation9] sm:$0xff]
    %v95 = vld [vmem:[#allocation9 + $0x8] sm:$0xff]
    %v96 = vstv %s93
    %v97 = vmul.f32 %v96, %v94
    %v98 = vmul.f32 %v96, %v95
    %v99 = vadd.f32 %v91, %v97
    %v100 = vadd.f32 %v92, %v98
    %s101 = sld [smem:[#allocation2 + $0x3]]
    %v102 = vld [vmem:[#allocation10] sm:$0xff]
    %v103 = vld [vmem:[#allocation10 + $0x8] sm:$0xff]
    %v104 = vstv %s101
    %v105 = vmul.f32 %v104, %v102
    %v106 = vmul.f32 %v104, %v103
    %v107 = vadd.f32 %v99, %v105
    %v108 = vadd.f32 %v100, %v106
    %109 = vst [vmem:[#allocation12] sm:$0xff] %v107
    %110 = vst [vmem:[#allocation12 + $0x8] sm:$0xff] %v108
    // Predicated region
    $region42: #{tpu_custom_call.1} parent=1 // pred_check
      _
    $region43: #{tpu_custom_call.1} parent=1 // pred_check_branch
      %112 = sbr.rel (0) target = $region45
    $region44: #{tpu_custom_call.1} parent=1 // pred_region
      %s114 = ssub.s32 256, 256
      %115 = vsyncadd [#allocation4], %s114
      %s117 = sshll.u32 [#allocation12], 4
      %s118 = int_to_ptr.vmem [resolvable:$true] %s117
      %120 = dma.vmem_to_hbm [thread:$0]  %s118, 256, %s5, [#allocation4]
    $region45: #{tpu_custom_call.1} parent=1 // pred_fallthru
      _
    // Predicated region
    $region46: #{tpu_custom_call.1} parent=1 // pred_check
      _
    $region47: #{tpu_custom_call.1} parent=1 // pred_check_branch
      %122 = sbr.rel (0) target = $region49
    $region48: #{tpu_custom_call.1} parent=1 // pred_region
      %123 = dma.done [#allocation4], 256
    $region49: #{tpu_custom_call.1} parent=1 // pred_fallthru
      _
    %124 = vsyncpa [#allocation3], 1
    %125 = vsyncpa [#allocation8], 1
    %126 = vsyncpa [#allocation11], 1
    %127 = vsyncpa [#allocation4], 1
    %128 = vsyncpa [#allocation5], 1

</llo_original>
